<compile_context>
chip_gen: v5e
topology: v5e:2x2
jax: 0.10.0
libtpu: 0.0.40
codegen_flags: <defaults>
</compile_context>

<pallas_src>
import functools
import math

import numpy as np
import jax
import jax.numpy as jnp
from jax.experimental import pallas as pl
from jax.experimental.pallas import tpu as pltpu

SubSpecNum = 2


def _silu(t):
    # sigmoid via EUP exp + approx reciprocal (keeps the divide off the VPU)
    return t * pl.reciprocal(1.0 + jnp.exp(-t), approx=True)


# ----------------------------------------------------------------------------
# Fused MV2Block_SSN kernel (one grid step = one (batch, sub-band) tile)
# ----------------------------------------------------------------------------
def _mv2_block_kernel(*refs, expand, use_res, stride, band, hidden, Wo,
                      half_lanes):
    if expand:
        (x_ref, w1_ref, s1_ref, b1_ref, tap_ref, b2_ref, w3_ref, b3_ref,
         *rest) = refs
    else:
        (x_ref, tap_ref, b2_ref, w3_ref, b3_ref, *rest) = refs
    if use_res:
        res_ref, o_ref = rest
    else:
        (o_ref,) = rest

    lo_h = Wo * hidden

    # ---- 1x1 expansion (block-diagonal MXU matmul) + SSN + SiLU ------------
    if expand:
        a = jnp.dot(x_ref[...], w1_ref[...],
                    preferred_element_type=jnp.float32)      # (th_in, lanes)
        # per-row SubSpec scale/bias; conv zero padding folded in as 0/0
        h = a * s1_ref[...] + b1_ref[...]
        h = _silu(h)
    else:
        h = x_ref[...].astype(jnp.float32)   # zero padding built by wrapper

    def taps_cols(rows, k):
        # columns k .. k+Wo-1 of a slab whose lanes are (col, channel) packed
        return rows[:, k * hidden:k * hidden + lo_h]

    # ---- 3x3 depthwise conv: 9 static value slices (fused im2col) ----------
    acc = jnp.zeros((band, lo_h), jnp.float32)
    if stride == 1:
        for dh in range(3):
            rows = h[dh:dh + band, :]
            for dw in range(3):
                t = 3 * dh + dw
                acc = acc + taps_cols(rows, dw) * tap_ref[t:t + 1, :]
    else:
        # wrapper stored rows / columns parity-reordered: [even ...][odd ...]
        h_even = h[:band + 1, :]
        h_odd = h[band + 1:, :]
        for dh in range(3):
            rblk = h_even if dh % 2 == 0 else h_odd
            rows = rblk[dh // 2:dh // 2 + band, :]
            ev = rows[:, :half_lanes]
            od = rows[:, half_lanes:]
            for dw in range(3):
                cblk = ev if dw % 2 == 0 else od
                t = 3 * dh + dw
                acc = acc + taps_cols(cblk, dw // 2) * tap_ref[t:t + 1, :]

    # ---- SubSpecNorm (scale already folded into the taps) + SiLU -----------
    y = _silu(acc + b2_ref[...])

    # ---- 1x1 projection (block-diagonal, s3 folded) + bias (+ residual) ----
    p = jnp.dot(y.astype(jnp.bfloat16), w3_ref[...],
                preferred_element_type=jnp.float32)          # (band, Wo*oup)
    out = p + b3_ref[...]
    if use_res:
        out = out + res_ref[...]
    o_ref[...] = out


# ----------------------------------------------------------------------------
# Wrapper: layout plumbing (slabs, halo windows, folded weights) + pallas_call
# ----------------------------------------------------------------------------
def mv2_block_ssn(x_nchw, params, *, stride=1, expansion=4, S=SubSpecNum):
    """Forward pass of MV2Block_SSN.  x: (B, Cin, H, W) -> (B, oup, Ho, Wo)."""
    assert stride in (1, 2)
    B, Cin, H, W = x_nchw.shape
    hidden = Cin * expansion
    expand = expansion != 1
    oup = params["w3"].shape[1]
    use_res = (stride == 1 and Cin == oup)

    Ho = (H - 1) // stride + 1
    Wo = (W - 1) // stride + 1
    assert H % S == 0 and Ho % S == 0, "frequency axis must split into S bands"
    band = Ho // S                       # output rows per sub-band
    th_in = (band - 1) * stride + 3      # padded input rows needed per band
    in_band = H // S

    # Slab width: pad W+2 so the slab lane count (and, for stride 2, each
    # column-parity half) is a multiple of 128.
    align = 128 * (2 if stride == 2 else 1)
    q = align // math.gcd(align, hidden)
    if stride == 2 and q % 2:
        q *= 2
    w2p = ((W + 2 + q - 1) // q) * q
    lanes = w2p * hidden                 # expanded-activation slab width
    half_lanes = (w2p // 2) * hidden
    lo_h = Wo * hidden                   # post-conv slab width
    lo = Wo * oup                        # output slab width

    if stride == 2:
        row_perm = np.concatenate([np.arange(0, th_in, 2),
                                   np.arange(1, th_in, 2)])
        col_perm = np.concatenate([np.arange(0, w2p, 2),
                                   np.arange(1, w2p, 2)])
    else:
        row_perm = np.arange(th_in)
        col_perm = np.arange(w2p)

    # ---- per-(batch, band) halo windows of the (zero padded) input ---------
    x_nhwc = jnp.transpose(x_nchw, (0, 2, 3, 1)).astype(jnp.float32)
    xpad = jnp.pad(x_nhwc, ((0, 0), (1, 1), (1, w2p - W - 1), (0, 0)))
    wins = [xpad[:, r * band * stride + row_perm] for r in range(S)]
    xw = jnp.stack(wins, axis=1)                   # (B, S, th_in, w2p, Cin)
    if expand:
        x_bands = xw.reshape(B, S, th_in, w2p * Cin).astype(jnp.bfloat16)
    else:
        # expansion == 1: this slab feeds the depthwise conv directly
        x_bands = xw[:, :, :, col_perm, :].reshape(B, S, th_in, lanes)

    args = [x_bands]
    in_specs = [pl.BlockSpec((None, None, th_in, x_bands.shape[-1]),
                             lambda b, r: (b, r, 0, 0))]

    if expand:
        # block-diagonal 1x1 expansion weight (columns permuted for stride 2)
        w1 = params["w1"].astype(jnp.float32)                  # (Cin, hidden)
        pm = jnp.asarray(np.arange(w2p)[:, None] == col_perm[None, :],
                         dtype=jnp.float32)                    # (w2p, w2p)
        w1bd = jnp.einsum("pj,ch->pcjh", pm, w1).reshape(
            w2p * Cin, lanes).astype(jnp.bfloat16)

        # per-(band, slab-row) SSN scale/bias with conv zero padding folded in
        rows_u = np.stack([r * band * stride + row_perm - 1 for r in range(S)])
        row_bandi = np.clip(rows_u // in_band, 0, S - 1)        # (S, th_in)
        row_ok = (rows_u >= 0) & (rows_u < H)
        col_ok = (col_perm >= 1) & (col_perm <= W)
        mask = jnp.asarray(row_ok[:, :, None] & col_ok[None, None, :],
                           dtype=jnp.float32)                   # (S, th_in, w2p)
        s1_sel = jnp.asarray(params["s1"], jnp.float32)[row_bandi]
        b1_sel = jnp.asarray(params["b1"], jnp.float32)[row_bandi]
        s1row = (s1_sel[:, :, None, :] * mask[..., None]).reshape(S, th_in, lanes)
        b1row = (b1_sel[:, :, None, :] * mask[..., None]).reshape(S, th_in, lanes)

        args += [w1bd, s1row, b1row]
        in_specs += [
            pl.BlockSpec(w1bd.shape, lambda b, r: (0, 0)),
            pl.BlockSpec((None, th_in, lanes), lambda b, r: (r, 0, 0)),
            pl.BlockSpec((None, th_in, lanes), lambda b, r: (r, 0, 0)),
        ]

    # depthwise taps with the post-conv SSN scale folded in, tiled over Wo
    tapw = (jnp.asarray(params["wdw"], jnp.float32)[None]
            * jnp.asarray(params["s2"], jnp.float32)[:, None, :])  # (S,9,hid)
    tapw = jnp.broadcast_to(tapw[:, :, None, :],
                            (S, 9, Wo, hidden)).reshape(S, 9, lo_h)
    b2l = jnp.broadcast_to(jnp.asarray(params["b2"], jnp.float32)[:, None, :],
                           (S, Wo, hidden)).reshape(S, 1, lo_h)

    # block-diagonal projection weight with the final SSN scale folded in
    w3s = (jnp.asarray(params["w3"], jnp.float32)[None]
           * jnp.asarray(params["s3"], jnp.float32)[:, None, :])  # (S,hid,oup)
    eye = jnp.eye(Wo, dtype=jnp.float32)
    w3bd = jnp.einsum("pq,shc->sphqc", eye, w3s).reshape(
        S, lo_h, lo).astype(jnp.bfloat16)
    b3l = jnp.broadcast_to(jnp.asarray(params["b3"], jnp.float32)[:, None, :],
                           (S, Wo, oup)).reshape(S, 1, lo)

    args += [tapw, b2l, w3bd, b3l]
    in_specs += [
        pl.BlockSpec((None, 9, lo_h), lambda b, r: (r, 0, 0)),
        pl.BlockSpec((None, 1, lo_h), lambda b, r: (r, 0, 0)),
        pl.BlockSpec((None, lo_h, lo), lambda b, r: (r, 0, 0)),
        pl.BlockSpec((None, 1, lo), lambda b, r: (r, 0, 0)),
    ]

    if use_res:
        # stride == 1  ->  Ho == H, Wo == W, oup == Cin : same slab layout
        res = x_nhwc.reshape(B, S, band, lo)
        args.append(res)
        in_specs.append(pl.BlockSpec((None, None, band, lo),
                                     lambda b, r: (b, r, 0, 0)))

    kernel = functools.partial(
        _mv2_block_kernel, expand=expand, use_res=use_res, stride=stride,
        band=band, hidden=hidden, Wo=Wo, half_lanes=half_lanes)

    out = pl.pallas_call(
        kernel,
        out_shape=jax.ShapeDtypeStruct((B, S, band, lo), jnp.float32),
        grid_spec=pltpu.PrefetchScalarGridSpec(
            num_scalar_prefetch=0,
            grid=(B, S),
            in_specs=in_specs,
            out_specs=pl.BlockSpec((None, None, band, lo),
                                   lambda b, r: (b, r, 0, 0))),
        compiler_params=pltpu.CompilerParams(
            dimension_semantics=("parallel", "parallel")),
    )(*args)

    out = out.reshape(B, Ho, Wo, oup)
    return jnp.transpose(out, (0, 3, 1, 2))            # back to NCHW


# ----------------------------------------------------------------------------
# Plain-JAX reference (same folded-affine math, same bf16 matmul inputs,
# fp32 residual)
# ----------------------------------------------------------------------------
def mv2_block_ssn_reference(x_nchw, params, *, stride=1, expansion=4,
                            S=SubSpecNum):
    x = jnp.transpose(x_nchw, (0, 2, 3, 1)).astype(jnp.float32)
    B, H, W, Cin = x.shape
    oup = params["w3"].shape[1]
    use_res = (stride == 1 and Cin == oup)

    def ssn(t, sc, bi):
        Hh = t.shape[1] // S
        return jnp.concatenate(
            [t[:, k * Hh:(k + 1) * Hh] * sc[k] + bi[k] for k in range(S)],
            axis=1)

    silu = lambda t: t * jax.nn.sigmoid(t)

    if expansion != 1:
        hidden = params["w1"].shape[1]
        h = jnp.dot(x.astype(jnp.bfloat16).reshape(-1, Cin),
                    params["w1"].astype(jnp.bfloat16),
                    preferred_element_type=jnp.float32).reshape(B, H, W, hidden)
        h = silu(ssn(h, params["s1"], params["b1"]))
    else:
        hidden = Cin
        h = x

    hp = jnp.pad(h, ((0, 0), (1, 1), (1, 1), (0, 0)))
    Ho = (H - 1) // stride + 1
    Wo = (W - 1) // stride + 1
    acc = jnp.zeros((B, Ho, Wo, hidden), jnp.float32)
    for dh in range(3):
        for dw in range(3):
            sl = hp[:, dh:dh + (Ho - 1) * stride + 1:stride,
                    dw:dw + (Wo - 1) * stride + 1:stride, :]
            acc = acc + sl * params["wdw"][3 * dh + dw]
    y = silu(ssn(acc, params["s2"], params["b2"]))
    p = jnp.dot(y.reshape(-1, hidden).astype(jnp.bfloat16),
                params["w3"].astype(jnp.bfloat16),
                preferred_element_type=jnp.float32).reshape(B, Ho, Wo, oup)
    out = ssn(p, params["s3"], params["b3"])
    if use_res:
        out = out + x
    return jnp.transpose(out, (0, 3, 1, 2))


# ----------------------------------------------------------------------------
# Deterministic synthetic parameters (PyTorch layouts generated, then folded)
# ----------------------------------------------------------------------------
def make_mv2_ssn_params(key, inp, oup, expansion, S=SubSpecNum):
    hidden = inp * expansion
    keys = jax.random.split(key, 8)

    def folded_norm(k, c):
        k1, k2, k3, k4 = jax.random.split(k, 4)
        gamma = 1.0 + 0.1 * jax.random.normal(k1, (S, c))
        beta = 0.05 * jax.random.normal(k2, (S, c))
        mean = 0.05 * jax.random.normal(k3, (S, c))
        var = 1.0 + 0.1 * jnp.abs(jax.random.normal(k4, (S, c)))
        scale = gamma / jnp.sqrt(var + 1e-5)
        return scale.astype(jnp.float32), (beta - mean * scale).astype(jnp.float32)

    p = {}
    if expansion != 1:
        # PyTorch 1x1 conv weight (hidden, inp, 1, 1) -> (inp, hidden)
        w1_t = jax.random.normal(keys[0], (hidden, inp, 1, 1)) / np.sqrt(inp)
        p["w1"] = jnp.transpose(w1_t[:, :, 0, 0], (1, 0)).astype(jnp.float32)
        p["s1"], p["b1"] = folded_norm(keys[1], hidden)
    # PyTorch depthwise 3x3 weight (hidden, 1, 3, 3) -> (9, hidden), taps (dh,dw)
    wdw_t = jax.random.normal(keys[2], (hidden, 1, 3, 3)) / 3.0
    p["wdw"] = jnp.transpose(wdw_t[:, 0].reshape(hidden, 9), (1, 0)).astype(jnp.float32)
    p["s2"], p["b2"] = folded_norm(keys[3], hidden)
    # PyTorch 1x1 conv weight (oup, hidden, 1, 1) -> (hidden, oup)
    w3_t = jax.random.normal(keys[4], (oup, hidden, 1, 1)) / np.sqrt(hidden)
    p["w3"] = jnp.transpose(w3_t[:, :, 0, 0], (1, 0)).astype(jnp.float32)
    p["s3"], p["b3"] = folded_norm(keys[5], oup)
    return p


# ----------------------------------------------------------------------------
if __name__ == "__main__":
    root = jax.random.PRNGKey(0)
    B, Cin, H, W = 2, 4, 16, 16

    cases = [
        dict(stride=1, oup=4, expansion=4),   # residual path
        dict(stride=2, oup=8, expansion=4),   # downsampling path
        dict(stride=1, oup=4, expansion=1),   # expansion == 1 path
    ]
    for i, cfg in enumerate(cases):
        kp, kx = jax.random.split(jax.random.fold_in(root, i))
        params = make_mv2_ssn_params(kp, Cin, cfg["oup"], cfg["expansion"])
        x = jax.random.normal(kx, (B, Cin, H, W), jnp.float32)

        fwd = jax.jit(functools.partial(mv2_block_ssn, stride=cfg["stride"],
                                        expansion=cfg["expansion"]))
        out = jax.block_until_ready(fwd(x, params))

        Ho = (H - 1) // cfg["stride"] + 1
        Wo = (W - 1) // cfg["stride"] + 1
        assert out.shape == (B, cfg["oup"], Ho, Wo), out.shape
        assert bool(jnp.all(jnp.isfinite(out)))

        ref = mv2_block_ssn_reference(x, params, stride=cfg["stride"],
                                      expansion=cfg["expansion"])
        np.testing.assert_allclose(np.asarray(out), np.asarray(ref),
                                   atol=2e-2, rtol=2e-2)

    print("KERNEL_OK")
</pallas_src>

<mosaic_0001>
module attributes {stable_mosaic.version = 11 : i64} {
  func.func @_mv2_block_kernel(%arg0: i32, %arg1: i32, %arg2: memref<1x1x10x96xbf16, #tpu.memory_space<vmem>>, %arg3: memref<96x384xbf16, #tpu.memory_space<vmem>>, %arg4: memref<1x10x384xf32, #tpu.memory_space<vmem>>, %arg5: memref<1x10x384xf32, #tpu.memory_space<vmem>>, %arg6: memref<1x9x256xf32, #tpu.memory_space<vmem>>, %arg7: memref<1x1x256xf32, #tpu.memory_space<vmem>>, %arg8: memref<1x256x64xbf16, #tpu.memory_space<vmem>>, %arg9: memref<1x1x64xf32, #tpu.memory_space<vmem>>, %arg10: memref<1x1x8x64xf32, #tpu.memory_space<vmem>>, %arg11: memref<1x1x8x64xf32, #tpu.memory_space<vmem>>) attributes {dimension_semantics = [#tpu.dimension_semantics<parallel>, #tpu.dimension_semantics<parallel>], iteration_bounds = array<i64: 2, 2>, scalar_prefetch = 0 : i64, scratch_operands = 0 : i64, tpu.core_type = #tpu.core_type<tc>, window_params = [{transform_indices = @transform_0, window_bounds = array<i64: 1, 1, 10, 96>}, {pipeline_mode = #tpu.pipeline_mode<synchronous>, transform_indices = @transform_1, window_bounds = array<i64: 96, 384>}, {transform_indices = @transform_2, window_bounds = array<i64: 1, 10, 384>}, {transform_indices = @transform_3, window_bounds = array<i64: 1, 10, 384>}, {transform_indices = @transform_4, window_bounds = array<i64: 1, 9, 256>}, {transform_indices = @transform_5, window_bounds = array<i64: 1, 1, 256>}, {transform_indices = @transform_6, window_bounds = array<i64: 1, 256, 64>}, {transform_indices = @transform_7, window_bounds = array<i64: 1, 1, 64>}, {transform_indices = @transform_8, window_bounds = array<i64: 1, 1, 8, 64>}, {transform_indices = @transform_9, window_bounds = array<i64: 1, 1, 8, 64>}]} {
    %c0 = arith.constant 0 : index
    %c0_0 = arith.constant 0 : index
    %c0_1 = arith.constant 0 : index
    %c0_2 = arith.constant 0 : index
    %0 = vector.load %arg2[%c0, %c0_0, %c0_1, %c0_2] : memref<1x1x10x96xbf16, #tpu.memory_space<vmem>>, vector<1x1x10x96xbf16>
    %1 = vector.shape_cast %0 : vector<1x1x10x96xbf16> to vector<10x96xbf16>
    %c0_3 = arith.constant 0 : index
    %c0_4 = arith.constant 0 : index
    %2 = vector.load %arg3[%c0_3, %c0_4] : memref<96x384xbf16, #tpu.memory_space<vmem>>, vector<96x384xbf16>
    %cst = arith.constant dense<0.000000e+00> : vector<10x384xf32>
    %3 = tpu.matmul %1, %2, %cst {dimension_numbers = #tpu.dot_dimension_numbers<[1], [0], [0], [1], [0, 0, 1, 1], [], []>} : vector<10x96xbf16>, vector<96x384xbf16>, vector<10x384xf32> -> vector<10x384xf32>
    %c0_5 = arith.constant 0 : index
    %c0_6 = arith.constant 0 : index
    %c0_7 = arith.constant 0 : index
    %4 = vector.load %arg4[%c0_5, %c0_6, %c0_7] : memref<1x10x384xf32, #tpu.memory_space<vmem>>, vector<1x10x384xf32>
    %5 = vector.shape_cast %4 : vector<1x10x384xf32> to vector<10x384xf32>
    %6 = arith.mulf %3, %5 : vector<10x384xf32>
    %c0_8 = arith.constant 0 : index
    %c0_9 = arith.constant 0 : index
    %c0_10 = arith.constant 0 : index
    %7 = vector.load %arg5[%c0_8, %c0_9, %c0_10] : memref<1x10x384xf32, #tpu.memory_space<vmem>>, vector<1x10x384xf32>
    %8 = vector.shape_cast %7 : vector<1x10x384xf32> to vector<10x384xf32>
    %9 = arith.addf %6, %8 : vector<10x384xf32>
    %cst_11 = arith.constant 0.000000e+00 : f32
    %10 = vector.broadcast %cst_11 : f32 to vector<10x384xf32>
    %11 = arith.subf %10, %9 : vector<10x384xf32>
    %12 = math.exp %11 : vector<10x384xf32>
    %cst_12 = arith.constant 1.000000e+00 : f32
    %13 = vector.broadcast %cst_12 : f32 to vector<10x384xf32>
    %14 = arith.addf %13, %12 : vector<10x384xf32>
    %15 = tpu.reciprocal %14 {approx = true} : vector<10x384xf32> -> vector<10x384xf32>
    %16 = arith.mulf %9, %15 : vector<10x384xf32>
    %cst_13 = arith.constant 0.000000e+00 : f32
    %17 = vector.broadcast %cst_13 : f32 to vector<8x256xf32>
    %18 = vector.extract_strided_slice %16 {offsets = [0, 0], sizes = [8, 384], strides = [1, 1]} : vector<10x384xf32> to vector<8x384xf32>
    %19 = vector.extract_strided_slice %18 {offsets = [0, 0], sizes = [8, 256], strides = [1, 1]} : vector<8x384xf32> to vector<8x256xf32>
    %c0_14 = arith.constant 0 : index
    %c0_15 = arith.constant 0 : index
    %c0_16 = arith.constant 0 : index
    %20 = vector.load %arg6[%c0_14, %c0_15, %c0_16] : memref<1x9x256xf32, #tpu.memory_space<vmem>>, vector<1x1x256xf32>
    %21 = vector.shape_cast %20 : vector<1x1x256xf32> to vector<1x256xf32>
    %22 = vector.broadcast %21 : vector<1x256xf32> to vector<8x256xf32>
    %23 = arith.mulf %19, %22 : vector<8x256xf32>
    %24 = arith.addf %17, %23 : vector<8x256xf32>
    %25 = vector.extract_strided_slice %18 {offsets = [0, 16], sizes = [8, 256], strides = [1, 1]} : vector<8x384xf32> to vector<8x256xf32>
    %c0_17 = arith.constant 0 : index
    %c1 = arith.constant 1 : index
    %c0_18 = arith.constant 0 : index
    %26 = vector.load %arg6[%c0_17, %c1, %c0_18] : memref<1x9x256xf32, #tpu.memory_space<vmem>>, vector<1x1x256xf32>
    %27 = vector.shape_cast %26 : vector<1x1x256xf32> to vector<1x256xf32>
    %28 = vector.broadcast %27 : vector<1x256xf32> to vector<8x256xf32>
    %29 = arith.mulf %25, %28 : vector<8x256xf32>
    %30 = arith.addf %24, %29 : vector<8x256xf32>
    %31 = vector.extract_strided_slice %18 {offsets = [0, 32], sizes = [8, 256], strides = [1, 1]} : vector<8x384xf32> to vector<8x256xf32>
    %c0_19 = arith.constant 0 : index
    %c2 = arith.constant 2 : index
    %c0_20 = arith.constant 0 : index
    %32 = vector.load %arg6[%c0_19, %c2, %c0_20] : memref<1x9x256xf32, #tpu.memory_space<vmem>>, vector<1x1x256xf32>
    %33 = vector.shape_cast %32 : vector<1x1x256xf32> to vector<1x256xf32>
    %34 = vector.broadcast %33 : vector<1x256xf32> to vector<8x256xf32>
    %35 = arith.mulf %31, %34 : vector<8x256xf32>
    %36 = arith.addf %30, %35 : vector<8x256xf32>
    %37 = vector.extract_strided_slice %16 {offsets = [1, 0], sizes = [8, 384], strides = [1, 1]} : vector<10x384xf32> to vector<8x384xf32>
    %38 = vector.extract_strided_slice %37 {offsets = [0, 0], sizes = [8, 256], strides = [1, 1]} : vector<8x384xf32> to vector<8x256xf32>
    %c0_21 = arith.constant 0 : index
    %c3 = arith.constant 3 : index
    %c0_22 = arith.constant 0 : index
    %39 = vector.load %arg6[%c0_21, %c3, %c0_22] : memref<1x9x256xf32, #tpu.memory_space<vmem>>, vector<1x1x256xf32>
    %40 = vector.shape_cast %39 : vector<1x1x256xf32> to vector<1x256xf32>
    %41 = vector.broadcast %40 : vector<1x256xf32> to vector<8x256xf32>
    %42 = arith.mulf %38, %41 : vector<8x256xf32>
    %43 = arith.addf %36, %42 : vector<8x256xf32>
    %44 = vector.extract_strided_slice %37 {offsets = [0, 16], sizes = [8, 256], strides = [1, 1]} : vector<8x384xf32> to vector<8x256xf32>
    %c0_23 = arith.constant 0 : index
    %c4 = arith.constant 4 : index
    %c0_24 = arith.constant 0 : index
    %45 = vector.load %arg6[%c0_23, %c4, %c0_24] : memref<1x9x256xf32, #tpu.memory_space<vmem>>, vector<1x1x256xf32>
    %46 = vector.shape_cast %45 : vector<1x1x256xf32> to vector<1x256xf32>
    %47 = vector.broadcast %46 : vector<1x256xf32> to vector<8x256xf32>
    %48 = arith.mulf %44, %47 : vector<8x256xf32>
    %49 = arith.addf %43, %48 : vector<8x256xf32>
    %50 = vector.extract_strided_slice %37 {offsets = [0, 32], sizes = [8, 256], strides = [1, 1]} : vector<8x384xf32> to vector<8x256xf32>
    %c0_25 = arith.constant 0 : index
    %c5 = arith.constant 5 : index
    %c0_26 = arith.constant 0 : index
    %51 = vector.load %arg6[%c0_25, %c5, %c0_26] : memref<1x9x256xf32, #tpu.memory_space<vmem>>, vector<1x1x256xf32>
    %52 = vector.shape_cast %51 : vector<1x1x256xf32> to vector<1x256xf32>
    %53 = vector.broadcast %52 : vector<1x256xf32> to vector<8x256xf32>
    %54 = arith.mulf %50, %53 : vector<8x256xf32>
    %55 = arith.addf %49, %54 : vector<8x256xf32>
    %56 = vector.extract_strided_slice %16 {offsets = [2, 0], sizes = [8, 384], strides = [1, 1]} : vector<10x384xf32> to vector<8x384xf32>
    %57 = vector.extract_strided_slice %56 {offsets = [0, 0], sizes = [8, 256], strides = [1, 1]} : vector<8x384xf32> to vector<8x256xf32>
    %c0_27 = arith.constant 0 : index
    %c6 = arith.constant 6 : index
    %c0_28 = arith.constant 0 : index
    %58 = vector.load %arg6[%c0_27, %c6, %c0_28] : memref<1x9x256xf32, #tpu.memory_space<vmem>>, vector<1x1x256xf32>
    %59 = vector.shape_cast %58 : vector<1x1x256xf32> to vector<1x256xf32>
    %60 = vector.broadcast %59 : vector<1x256xf32> to vector<8x256xf32>
    %61 = arith.mulf %57, %60 : vector<8x256xf32>
    %62 = arith.addf %55, %61 : vector<8x256xf32>
    %63 = vector.extract_strided_slice %56 {offsets = [0, 16], sizes = [8, 256], strides = [1, 1]} : vector<8x384xf32> to vector<8x256xf32>
    %c0_29 = arith.constant 0 : index
    %c7 = arith.constant 7 : index
    %c0_30 = arith.constant 0 : index
    %64 = vector.load %arg6[%c0_29, %c7, %c0_30] : memref<1x9x256xf32, #tpu.memory_space<vmem>>, vector<1x1x256xf32>
    %65 = vector.shape_cast %64 : vector<1x1x256xf32> to vector<1x256xf32>
    %66 = vector.broadcast %65 : vector<1x256xf32> to vector<8x256xf32>
    %67 = arith.mulf %63, %66 : vector<8x256xf32>
    %68 = arith.addf %62, %67 : vector<8x256xf32>
    %69 = vector.extract_strided_slice %56 {offsets = [0, 32], sizes = [8, 256], strides = [1, 1]} : vector<8x384xf32> to vector<8x256xf32>
    %c0_31 = arith.constant 0 : index
    %c8 = arith.constant 8 : index
    %c0_32 = arith.constant 0 : index
    %70 = vector.load %arg6[%c0_31, %c8, %c0_32] : memref<1x9x256xf32, #tpu.memory_space<vmem>>, vector<1x1x256xf32>
    %71 = vector.shape_cast %70 : vector<1x1x256xf32> to vector<1x256xf32>
    %72 = vector.broadcast %71 : vector<1x256xf32> to vector<8x256xf32>
    %73 = arith.mulf %69, %72 : vector<8x256xf32>
    %74 = arith.addf %68, %73 : vector<8x256xf32>
    %c0_33 = arith.constant 0 : index
    %c0_34 = arith.constant 0 : index
    %c0_35 = arith.constant 0 : index
    %75 = vector.load %arg7[%c0_33, %c0_34, %c0_35] : memref<1x1x256xf32, #tpu.memory_space<vmem>>, vector<1x1x256xf32>
    %76 = vector.shape_cast %75 : vector<1x1x256xf32> to vector<1x256xf32>
    %77 = vector.broadcast %76 : vector<1x256xf32> to vector<8x256xf32>
    %78 = arith.addf %74, %77 : vector<8x256xf32>
    %cst_36 = arith.constant 0.000000e+00 : f32
    %79 = vector.broadcast %cst_36 : f32 to vector<8x256xf32>
    %80 = arith.subf %79, %78 : vector<8x256xf32>
    %81 = math.exp %80 : vector<8x256xf32>
    %cst_37 = arith.constant 1.000000e+00 : f32
    %82 = vector.broadcast %cst_37 : f32 to vector<8x256xf32>
    %83 = arith.addf %82, %81 : vector<8x256xf32>
    %84 = tpu.reciprocal %83 {approx = true} : vector<8x256xf32> -> vector<8x256xf32>
    %85 = arith.mulf %78, %84 : vector<8x256xf32>
    %86 = arith.truncf %85 : vector<8x256xf32> to vector<8x256xbf16>
    %c0_38 = arith.constant 0 : index
    %c0_39 = arith.constant 0 : index
    %c0_40 = arith.constant 0 : index
    %87 = vector.load %arg8[%c0_38, %c0_39, %c0_40] : memref<1x256x64xbf16, #tpu.memory_space<vmem>>, vector<1x256x64xbf16>
    %88 = vector.shape_cast %87 : vector<1x256x64xbf16> to vector<256x64xbf16>
    %cst_41 = arith.constant dense<0.000000e+00> : vector<8x64xf32>
    %89 = tpu.matmul %86, %88, %cst_41 {dimension_numbers = #tpu.dot_dimension_numbers<[1], [0], [0], [1], [0, 0, 1, 1], [], []>} : vector<8x256xbf16>, vector<256x64xbf16>, vector<8x64xf32> -> vector<8x64xf32>
    %c0_42 = arith.constant 0 : index
    %c0_43 = arith.constant 0 : index
    %c0_44 = arith.constant 0 : index
    %90 = vector.load %arg9[%c0_42, %c0_43, %c0_44] : memref<1x1x64xf32, #tpu.memory_space<vmem>>, vector<1x1x64xf32>
    %91 = vector.shape_cast %90 : vector<1x1x64xf32> to vector<1x64xf32>
    %92 = vector.broadcast %91 : vector<1x64xf32> to vector<8x64xf32>
    %93 = arith.addf %89, %92 : vector<8x64xf32>
    %c0_45 = arith.constant 0 : index
    %c0_46 = arith.constant 0 : index
    %c0_47 = arith.constant 0 : index
    %c0_48 = arith.constant 0 : index
    %94 = vector.load %arg10[%c0_45, %c0_46, %c0_47, %c0_48] : memref<1x1x8x64xf32, #tpu.memory_space<vmem>>, vector<1x1x8x64xf32>
    %95 = vector.shape_cast %94 : vector<1x1x8x64xf32> to vector<8x64xf32>
    %96 = arith.addf %93, %95 : vector<8x64xf32>
    %c0_49 = arith.constant 0 : index
    %c0_50 = arith.constant 0 : index
    %c0_51 = arith.constant 0 : index
    %c0_52 = arith.constant 0 : index
    %97 = vector.load %arg11[%c0_49, %c0_50, %c0_51, %c0_52] : memref<1x1x8x64xf32, #tpu.memory_space<vmem>>, vector<1x1x8x64xf32>
    %98 = vector.shape_cast %97 : vector<1x1x8x64xf32> to vector<8x64xf32>
    %99 = vector.shape_cast %96 : vector<8x64xf32> to vector<1x1x8x64xf32>
    tpu.vector_store %arg11[%c0_49, %c0_50, %c0_51, %c0_52], %99 {strides = array<i32>} : memref<1x1x8x64xf32, #tpu.memory_space<vmem>>, vector<1x1x8x64xf32>,
    return
  }
  func.func @transform_0(%arg0: i32, %arg1: i32) -> (i32, i32, i32, i32) {
    %c0_i32 = arith.constant 0 : i32
    %c0_i32_0 = arith.constant 0 : i32
    %c0_i32_1 = arith.constant 0 : i32
    return %arg0, %arg1, %c0_i32, %c0_i32_0 : i32, i32, i32, i32
  }
  func.func @transform_1(%arg0: i32, %arg1: i32) -> (i32, i32) {
    %c0_i32 = arith.constant 0 : i32
    %c0_i32_0 = arith.constant 0 : i32
    %c0_i32_1 = arith.constant 0 : i32
    return %c0_i32, %c0_i32_0 : i32, i32
  }
  func.func @transform_2(%arg0: i32, %arg1: i32) -> (i32, i32, i32) {
    %c0_i32 = arith.constant 0 : i32
    %c0_i32_0 = arith.constant 0 : i32
    %c0_i32_1 = arith.constant 0 : i32
    return %arg1, %c0_i32, %c0_i32_0 : i32, i32, i32
  }
  func.func @transform_3(%arg0: i32, %arg1: i32) -> (i32, i32, i32) {
    %c0_i32 = arith.constant 0 : i32
    %c0_i32_0 = arith.constant 0 : i32
    %c0_i32_1 = arith.constant 0 : i32
    return %arg1, %c0_i32, %c0_i32_0 : i32, i32, i32
  }
  func.func @transform_4(%arg0: i32, %arg1: i32) -> (i32, i32, i32) {
    %c0_i32 = arith.constant 0 : i32
    %c0_i32_0 = arith.constant 0 : i32
    %c0_i32_1 = arith.constant 0 : i32
    return %arg1, %c0_i32, %c0_i32_0 : i32, i32, i32
  }
  func.func @transform_5(%arg0: i32, %arg1: i32) -> (i32, i32, i32) {
    %c0_i32 = arith.constant 0 : i32
    %c0_i32_0 = arith.constant 0 : i32
    %c0_i32_1 = arith.constant 0 : i32
    return %arg1, %c0_i32, %c0_i32_0 : i32, i32, i32
  }
  func.func @transform_6(%arg0: i32, %arg1: i32) -> (i32, i32, i32) {
    %c0_i32 = arith.constant 0 : i32
    %c0_i32_0 = arith.constant 0 : i32
    %c0_i32_1 = arith.constant 0 : i32
    return %arg1, %c0_i32, %c0_i32_0 : i32, i32, i32
  }
  func.func @transform_7(%arg0: i32, %arg1: i32) -> (i32, i32, i32) {
    %c0_i32 = arith.constant 0 : i32
    %c0_i32_0 = arith.constant 0 : i32
    %c0_i32_1 = arith.constant 0 : i32
    return %arg1, %c0_i32, %c0_i32_0 : i32, i32, i32
  }
  func.func @transform_8(%arg0: i32, %arg1: i32) -> (i32, i32, i32, i32) {
    %c0_i32 = arith.constant 0 : i32
    %c0_i32_0 = arith.constant 0 : i32
    %c0_i32_1 = arith.constant 0 : i32
    return %arg0, %arg1, %c0_i32, %c0_i32_0 : i32, i32, i32, i32
  }
  func.func @transform_9(%arg0: i32, %arg1: i32) -> (i32, i32, i32, i32) {
    %c0_i32 = arith.constant 0 : i32
    %c0_i32_0 = arith.constant 0 : i32
    %c0_i32_1 = arith.constant 0 : i32
    return %arg0, %arg1, %c0_i32, %c0_i32_0 : i32, i32, i32, i32
  }
}

</mosaic_0001>

<llo_original>
// kernel: mv2_block_ssn.1
$region0: #{mv2_block_ssn.1}
  #allocation0 [shape = 'u32[]', space=smem, size = 0x4, offset = 0x4, fixed_abs, tag = 'smem constant byte address 0x4 - core index']
  #allocation1 [shape = 'u32[72,128]{1,0:T(1,128)}', space=vmem, size = 0x9000, scoped, tag = 'internal scratch']
  %s0 = inlined_call_operand.vmem [shape: bf16[2,2,10,96], index: 0, kind: input, shape index: {}]
  %s1 = inlined_call_operand.vmem [shape: bf16[96,384], index: 1, kind: input, shape index: {}]
  %s2 = inlined_call_operand.vmem [shape: f32[2,10,384], index: 2, kind: input, shape index: {}]
  %s3 = inlined_call_operand.vmem [shape: f32[2,10,384], index: 3, kind: input, shape index: {}]
  %s4 = inlined_call_operand.vmem [shape: f32[2,9,256], index: 4, kind: input, shape index: {}]
  %s5 = inlined_call_operand.vmem [shape: f32[2,1,256], index: 5, kind: input, shape index: {}]
  %s6 = inlined_call_operand.vmem [shape: bf16[2,256,64], index: 6, kind: input, shape index: {}]
  %s7 = inlined_call_operand.vmem [shape: f32[2,1,64], index: 7, kind: input, shape index: {}]
  %s8 = inlined_call_operand.vmem [shape: f32[2,2,8,64], index: 8, kind: input, shape index: {}]
  %s9 = inlined_call_operand.vmem [shape: f32[2,2,8,64], index: 9, kind: output, shape index: {}]
  %s10 = sld [smem:[#allocation0]]
  $region69: #{mv2_block_ssn.1} parent=0
    _
  %s12 = ssub.s32 1, %s10
  %s13 = scalar_select 0, %s12, %s10
  loop: start=0, step=1, limit=6
  $region2: #{mv2_block_ssn.1} parent=0 // loop_pre_header
    _
  $region3: #{mv2_block_ssn.1} parent=0 // loop_header
    %s15 = sphi 0, %s19
    %p16 = scmp.ge.s32.totalorder %s15, 6
    %s22 = sphi 0, %s34
    %s23 = sphi 0, %s30
    %s24 = sphi 0, %s22
    %s25 = sphi 0, %s23
    %s26 = sphi 0, %s24
    %s27 = sphi 0, %s25
    %s39 = sphi 0, %s41
    %s42 = sphi 0, %s39
    %s43 = sphi 0, %s42
    %s59 = sphi 0, %s43
    %s63 = sphi 0, %s63
    %s65 = sphi 0, %s63
    %s66 = sphi 0, %s65
    %s80 = sphi 0, %s66
    %s86 = sphi 0, %s88
    %s89 = sphi 0, %s86
    %s90 = sphi 0, %s89
    %s106 = sphi 0, %s90
    %s112 = sphi 0, %s114
    %s115 = sphi 0, %s112
    %s116 = sphi 0, %s115
    %s132 = sphi 0, %s116
    %s138 = sphi 0, %s140
    %s141 = sphi 0, %s138
    %s142 = sphi 0, %s141
    %s158 = sphi 0, %s142
    %s164 = sphi 0, %s166
    %s167 = sphi 0, %s164
    %s168 = sphi 0, %s167
    %s184 = sphi 0, %s168
    %s190 = sphi 0, %s192
    %s193 = sphi 0, %s190
    %s194 = sphi 0, %s193
    %s210 = sphi 0, %s194
    %s216 = sphi 0, %s218
    %s219 = sphi 0, %s216
    %s220 = sphi 0, %s219
    %s236 = sphi 0, %s220
    %s244 = sphi 0, %s246
    %s247 = sphi 0, %s244
    %s248 = sphi 0, %s247
    %s264 = sphi 0, %s248
    %s272 = sphi 0, %s274
    %s275 = sphi 0, %s272
    %s276 = sphi 0, %s275
    %s292 = sphi 0, %s276
  $region4: #{mv2_block_ssn.1} parent=0 // loop_header_branch
    %18 = sbr.rel (%p16) target = $region8
  $region5: #{mv2_block_ssn.1} parent=0 // loop_body
    %s20 = ssub.s32 %s15, 1
    %s21 = ssub.s32 %s15, 2
    %s28 = sadd.s32 1, %s23
    %p29 = scmp.ge.s32.totalorder %s28, 2
    %s30 = scalar_select %p29, 0, %s28
    %s31 = sadd.s32 1, %s22
    %s32 = scalar_select %p29, %s31, %s22
    %p33 = scmp.ge.s32.totalorder %s32, 2
    %s34 = scalar_select %p33, 0, %s32
    %s35 = ssub.s32 %s22, %s34
    %s36 = ssub.s32 %s23, %s30
    %s37 = sor.u32 %s35, %s36
    %p38 = scmp.eq.s32.totalorder %s37, 0
    %s40 = sadd.s32 %s39, 1
    %s41 = scalar_select %p38, %s39, %s40
    %p44 = pneg %p38
    %p45 = scmp.eq.s32.totalorder %s15, 3
    %p46 = por %p44, %p45
    %p47 = scmp.ne.s32.totalorder %s39, %s42
    %p48 = scmp.eq.s32.totalorder %s15, 0
    %p49 = por %p47, %p48
    %p50 = scmp.ne.s32.totalorder %s39, %s42
    %p51 = scmp.eq.s32.totalorder %s20, 3
    %p52 = por %p50, %p51
    %p53 = scmp.ne.s32.totalorder %s42, %s43
    %p54 = scmp.eq.s32.totalorder %s20, 0
    %p55 = por %p53, %p54
    %p56 = scmp.ne.s32.totalorder %s42, %s43
    %p57 = scmp.eq.s32.totalorder %s21, 3
    %p58 = por %p56, %p57
    %p60 = scmp.ne.s32.totalorder %s43, %s59
    %p61 = scmp.eq.s32.totalorder %s21, 0
    %p62 = por %p60, %p61
    %s64 = sadd.s32 %s63, 1
    %p67 = scmp.eq.s32.totalorder %s15, 3
    %p68 = scmp.ne.s32.totalorder %s63, %s65
    %p69 = scmp.eq.s32.totalorder %s15, 0
    %p70 = por %p68, %p69
    %p71 = scmp.ne.s32.totalorder %s63, %s65
    %p72 = scmp.eq.s32.totalorder %s20, 3
    %p73 = por %p71, %p72
    %p74 = scmp.ne.s32.totalorder %s65, %s66
    %p75 = scmp.eq.s32.totalorder %s20, 0
    %p76 = por %p74, %p75
    %p77 = scmp.ne.s32.totalorder %s65, %s66
    %p78 = scmp.eq.s32.totalorder %s21, 3
    %p79 = por %p77, %p78
    %p81 = scmp.ne.s32.totalorder %s66, %s80
    %p82 = scmp.eq.s32.totalorder %s21, 0
    %p83 = por %p81, %p82
    %s84 = ssub.s32 %s23, %s30
    %p85 = scmp.eq.s32.totalorder %s84, 0
    %s87 = sadd.s32 %s86, 1
    %s88 = scalar_select %p85, %s86, %s87
    %p91 = pneg %p85
    %p92 = scmp.eq.s32.totalorder %s15, 3
    %p93 = por %p91, %p92
    %p94 = scmp.ne.s32.totalorder %s86, %s89
    %p95 = scmp.eq.s32.totalorder %s15, 0
    %p96 = por %p94, %p95
    %p97 = scmp.ne.s32.totalorder %s86, %s89
    %p98 = scmp.eq.s32.totalorder %s20, 3
    %p99 = por %p97, %p98
    %p100 = scmp.ne.s32.totalorder %s89, %s90
    %p101 = scmp.eq.s32.totalorder %s20, 0
    %p102 = por %p100, %p101
    %p103 = scmp.ne.s32.totalorder %s89, %s90
    %p104 = scmp.eq.s32.totalorder %s21, 3
    %p105 = por %p103, %p104
    %p107 = scmp.ne.s32.totalorder %s90, %s106
    %p108 = scmp.eq.s32.totalorder %s21, 0
    %p109 = por %p107, %p108
    %s110 = ssub.s32 %s23, %s30
    %p111 = scmp.eq.s32.totalorder %s110, 0
    %s113 = sadd.s32 %s112, 1
    %s114 = scalar_select %p111, %s112, %s113
    %p117 = pneg %p111
    %p118 = scmp.eq.s32.totalorder %s15, 3
    %p119 = por %p117, %p118
    %p120 = scmp.ne.s32.totalorder %s112, %s115
    %p121 = scmp.eq.s32.totalorder %s15, 0
    %p122 = por %p120, %p121
    %p123 = scmp.ne.s32.totalorder %s112, %s115
    %p124 = scmp.eq.s32.totalorder %s20, 3
    %p125 = por %p123, %p124
    %p126 = scmp.ne.s32.totalorder %s115, %s116
    %p127 = scmp.eq.s32.totalorder %s20, 0
    %p128 = por %p126, %p127
    %p129 = scmp.ne.s32.totalorder %s115, %s116
    %p130 = scmp.eq.s32.totalorder %s21, 3
    %p131 = por %p129, %p130
    %p133 = scmp.ne.s32.totalorder %s116, %s132
    %p134 = scmp.eq.s32.totalorder %s21, 0
    %p135 = por %p133, %p134
    %s136 = ssub.s32 %s23, %s30
    %p137 = scmp.eq.s32.totalorder %s136, 0
    %s139 = sadd.s32 %s138, 1
    %s140 = scalar_select %p137, %s138, %s139
    %p143 = pneg %p137
    %p144 = scmp.eq.s32.totalorder %s15, 3
    %p145 = por %p143, %p144
    %p146 = scmp.ne.s32.totalorder %s138, %s141
    %p147 = scmp.eq.s32.totalorder %s15, 0
    %p148 = por %p146, %p147
    %p149 = scmp.ne.s32.totalorder %s138, %s141
    %p150 = scmp.eq.s32.totalorder %s20, 3
    %p151 = por %p149, %p150
    %p152 = scmp.ne.s32.totalorder %s141, %s142
    %p153 = scmp.eq.s32.totalorder %s20, 0
    %p154 = por %p152, %p153
    %p155 = scmp.ne.s32.totalorder %s141, %s142
    %p156 = scmp.eq.s32.totalorder %s21, 3
    %p157 = por %p155, %p156
    %p159 = scmp.ne.s32.totalorder %s142, %s158
    %p160 = scmp.eq.s32.totalorder %s21, 0
    %p161 = por %p159, %p160
    %s162 = ssub.s32 %s23, %s30
    %p163 = scmp.eq.s32.totalorder %s162, 0
    %s165 = sadd.s32 %s164, 1
    %s166 = scalar_select %p163, %s164, %s165
    %p169 = pneg %p163
    %p170 = scmp.eq.s32.totalorder %s15, 3
    %p171 = por %p169, %p170
    %p172 = scmp.ne.s32.totalorder %s164, %s167
    %p173 = scmp.eq.s32.totalorder %s15, 0
    %p174 = por %p172, %p173
    %p175 = scmp.ne.s32.totalorder %s164, %s167
    %p176 = scmp.eq.s32.totalorder %s20, 3
    %p177 = por %p175, %p176
    %p178 = scmp.ne.s32.totalorder %s167, %s168
    %p179 = scmp.eq.s32.totalorder %s20, 0
    %p180 = por %p178, %p179
    %p181 = scmp.ne.s32.totalorder %s167, %s168
    %p182 = scmp.eq.s32.totalorder %s21, 3
    %p183 = por %p181, %p182
    %p185 = scmp.ne.s32.totalorder %s168, %s184
    %p186 = scmp.eq.s32.totalorder %s21, 0
    %p187 = por %p185, %p186
    %s188 = ssub.s32 %s23, %s30
    %p189 = scmp.eq.s32.totalorder %s188, 0
    %s191 = sadd.s32 %s190, 1
    %s192 = scalar_select %p189, %s190, %s191
    %p195 = pneg %p189
    %p196 = scmp.eq.s32.totalorder %s15, 3
    %p197 = por %p195, %p196
    %p198 = scmp.ne.s32.totalorder %s190, %s193
    %p199 = scmp.eq.s32.totalorder %s15, 0
    %p200 = por %p198, %p199
    %p201 = scmp.ne.s32.totalorder %s190, %s193
    %p202 = scmp.eq.s32.totalorder %s20, 3
    %p203 = por %p201, %p202
    %p204 = scmp.ne.s32.totalorder %s193, %s194
    %p205 = scmp.eq.s32.totalorder %s20, 0
    %p206 = por %p204, %p205
    %p207 = scmp.ne.s32.totalorder %s193, %s194
    %p208 = scmp.eq.s32.totalorder %s21, 3
    %p209 = por %p207, %p208
    %p211 = scmp.ne.s32.totalorder %s194, %s210
    %p212 = scmp.eq.s32.totalorder %s21, 0
    %p213 = por %p211, %p212
    %s214 = ssub.s32 %s23, %s30
    %p215 = scmp.eq.s32.totalorder %s214, 0
    %s217 = sadd.s32 %s216, 1
    %s218 = scalar_select %p215, %s216, %s217
    %p221 = pneg %p215
    %p222 = scmp.eq.s32.totalorder %s15, 3
    %p223 = por %p221, %p222
    %p224 = scmp.ne.s32.totalorder %s216, %s219
    %p225 = scmp.eq.s32.totalorder %s15, 0
    %p226 = por %p224, %p225
    %p227 = scmp.ne.s32.totalorder %s216, %s219
    %p228 = scmp.eq.s32.totalorder %s20, 3
    %p229 = por %p227, %p228
    %p230 = scmp.ne.s32.totalorder %s219, %s220
    %p231 = scmp.eq.s32.totalorder %s20, 0
    %p232 = por %p230, %p231
    %p233 = scmp.ne.s32.totalorder %s219, %s220
    %p234 = scmp.eq.s32.totalorder %s21, 3
    %p235 = por %p233, %p234
    %p237 = scmp.ne.s32.totalorder %s220, %s236
    %p238 = scmp.eq.s32.totalorder %s21, 0
    %p239 = por %p237, %p238
    %s240 = ssub.s32 %s22, %s34
    %s241 = ssub.s32 %s23, %s30
    %s242 = sor.u32 %s240, %s241
    %p243 = scmp.eq.s32.totalorder %s242, 0
    %s245 = sadd.s32 %s244, 1
    %s246 = scalar_select %p243, %s244, %s245
    %p249 = pneg %p243
    %p250 = scmp.eq.s32.totalorder %s15, 3
    %p251 = por %p249, %p250
    %p252 = scmp.ne.s32.totalorder %s244, %s247
    %p253 = scmp.eq.s32.totalorder %s15, 0
    %p254 = por %p252, %p253
    %p255 = scmp.ne.s32.totalorder %s244, %s247
    %p256 = scmp.eq.s32.totalorder %s20, 3
    %p257 = por %p255, %p256
    %p258 = scmp.ne.s32.totalorder %s247, %s248
    %p259 = scmp.eq.s32.totalorder %s20, 0
    %p260 = por %p258, %p259
    %p261 = scmp.ne.s32.totalorder %s247, %s248
    %p262 = scmp.eq.s32.totalorder %s21, 3
    %p263 = por %p261, %p262
    %p265 = scmp.ne.s32.totalorder %s248, %s264
    %p266 = scmp.eq.s32.totalorder %s21, 0
    %p267 = por %p265, %p266
    %s268 = ssub.s32 %s22, %s34
    %s269 = ssub.s32 %s23, %s30
    %s270 = sor.u32 %s268, %s269
    %p271 = scmp.eq.s32.totalorder %s270, 0
    %s273 = sadd.s32 %s272, 1
    %s274 = scalar_select %p271, %s272, %s273
    %p277 = pneg %p271
    %p278 = scmp.eq.s32.totalorder %s15, 3
    %p279 = por %p277, %p278
    %p280 = scmp.ne.s32.totalorder %s272, %s275
    %p281 = scmp.eq.s32.totalorder %s15, 0
    %p282 = por %p280, %p281
    %p283 = scmp.ne.s32.totalorder %s272, %s275
    %p284 = scmp.eq.s32.totalorder %s20, 3
    %p285 = por %p283, %p284
    %p286 = scmp.ne.s32.totalorder %s275, %s276
    %p287 = scmp.eq.s32.totalorder %s20, 0
    %p288 = por %p286, %p287
    %p289 = scmp.ne.s32.totalorder %s275, %s276
    %p290 = scmp.eq.s32.totalorder %s21, 3
    %p291 = por %p289, %p290
    %p293 = scmp.ne.s32.totalorder %s276, %s292
    %p294 = scmp.eq.s32.totalorder %s21, 0
    %p295 = por %p293, %p294
    %p296 = scmp.le.s32.totalorder 1, %s15
    %p297 = scmp.lt.s32.totalorder %s15, 5
    %p298 = pnand %p296, %p297
    %p299 = pneg %p298
    // Predicated region
    $region9: #{mv2_block_ssn.1} parent=5 // pred_check
      _
    $region10: #{mv2_block_ssn.1} parent=5 // pred_check_branch
      %301 = sbr.rel (%p298) target = $region12
    $region11: #{mv2_block_ssn.1} parent=5 // pred_region
      %s302 = ssub.s32 %s15, 1
      // Predicated region
      $region13: #{mv2_block_ssn.1} parent=11 // pred_check
        %p303 = pneg %p76
      $region14: #{mv2_block_ssn.1} parent=11 // pred_check_branch
        %305 = sbr.rel (%p303) target = $region16
      $region15: #{mv2_block_ssn.1} parent=11 // pred_region
        _
      $region16: #{mv2_block_ssn.1} parent=11 // pred_fallthru
        _
    $region12: #{mv2_block_ssn.1} parent=5 // pred_fallthru
      _
    %p306 = scmp.lt.s32.totalorder %s15, 4
    // Predicated region
    $region17: #{mv2_block_ssn.1} parent=5 // pred_check
      %p307 = pneg %p306
    $region18: #{mv2_block_ssn.1} parent=5 // pred_check_branch
      %309 = sbr.rel (%p307) target = $region20
    $region19: #{mv2_block_ssn.1} parent=5 // pred_region
      // Predicated region
      $region21: #{mv2_block_ssn.1} parent=19 // pred_check
        %p310 = pneg %p49
      $region22: #{mv2_block_ssn.1} parent=19 // pred_check_branch
        %312 = sbr.rel (%p310) target = $region24
      $region23: #{mv2_block_ssn.1} parent=19 // pred_region
        %p313 = scmp.lt.s32.totalorder %s22, 1
        %s314 = scalar_select %p313, %s22, 1
        %p315 = scmp.lt.s32.totalorder %s23, 1
        %s316 = scalar_select %p315, %s23, 1
        %s317 = smul.addr %s316, 2
        %s318 = smul.addr %s314, 4
        %s319 = sadd.s32 %s317, %s318
        %s320 = smul.addr %s319, 4
        %s321 = scalar_lea.vmem %s0, %s320
      $region24: #{mv2_block_ssn.1} parent=19 // pred_fallthru
        _
      // Predicated region
      $region25: #{mv2_block_ssn.1} parent=19 // pred_check
        %p322 = pneg %p96
      $region26: #{mv2_block_ssn.1} parent=19 // pred_check_branch
        %324 = sbr.rel (%p322) target = $region28
      $region27: #{mv2_block_ssn.1} parent=19 // pred_region
        %p325 = scmp.lt.s32.totalorder %s23, 1
        %s326 = scalar_select %p325, %s23, 1
        %s327 = smul.addr %s326, 6
        %s328 = smul.addr %s327, 8
        %s329 = scalar_lea.vmem %s2, %s328
      $region28: #{mv2_block_ssn.1} parent=19 // pred_fallthru
        _
      // Predicated region
      $region29: #{mv2_block_ssn.1} parent=19 // pred_check
        %p330 = pneg %p122
      $region30: #{mv2_block_ssn.1} parent=19 // pred_check_branch
        %332 = sbr.rel (%p330) target = $region32
      $region31: #{mv2_block_ssn.1} parent=19 // pred_region
        %p333 = scmp.lt.s32.totalorder %s23, 1
        %s334 = scalar_select %p333, %s23, 1
        %s335 = smul.addr %s334, 6
        %s336 = smul.addr %s335, 8
        %s337 = scalar_lea.vmem %s3, %s336
      $region32: #{mv2_block_ssn.1} parent=19 // pred_fallthru
        _
      // Predicated region
      $region33: #{mv2_block_ssn.1} parent=19 // pred_check
        %p338 = pneg %p148
      $region34: #{mv2_block_ssn.1} parent=19 // pred_check_branch
        %340 = sbr.rel (%p338) target = $region36
      $region35: #{mv2_block_ssn.1} parent=19 // pred_region
        %p341 = scmp.lt.s32.totalorder %s23, 1
        %s342 = scalar_select %p341, %s23, 1
        %s343 = smul.addr %s342, 4
        %s344 = smul.addr %s343, 8
        %s345 = scalar_lea.vmem %s4, %s344
      $region36: #{mv2_block_ssn.1} parent=19 // pred_fallthru
        _
      // Predicated region
      $region37: #{mv2_block_ssn.1} parent=19 // pred_check
        %p346 = pneg %p174
      $region38: #{mv2_block_ssn.1} parent=19 // pred_check_branch
        %348 = sbr.rel (%p346) target = $region40
      $region39: #{mv2_block_ssn.1} parent=19 // pred_region
        %p349 = scmp.lt.s32.totalorder %s23, 1
        %s350 = scalar_select %p349, %s23, 1
        %s351 = smul.addr %s350, 2
        %s352 = scalar_lea.vmem %s5, %s351
      $region40: #{mv2_block_ssn.1} parent=19 // pred_fallthru
        _
      // Predicated region
      $region41: #{mv2_block_ssn.1} parent=19 // pred_check
        %p353 = pneg %p200
      $region42: #{mv2_block_ssn.1} parent=19 // pred_check_branch
        %355 = sbr.rel (%p353) target = $region44
      $region43: #{mv2_block_ssn.1} parent=19 // pred_region
        %p356 = scmp.lt.s32.totalorder %s23, 1
        %s357 = scalar_select %p356, %s23, 1
        %s358 = smul.addr %s357, 32
        %s359 = smul.addr %s358, 4
        %s360 = scalar_lea.vmem %s6, %s359
      $region44: #{mv2_block_ssn.1} parent=19 // pred_fallthru
        _
      // Predicated region
      $region45: #{mv2_block_ssn.1} parent=19 // pred_check
        %p361 = pneg %p226
      $region46: #{mv2_block_ssn.1} parent=19 // pred_check_branch
        %363 = sbr.rel (%p361) target = $region48
      $region47: #{mv2_block_ssn.1} parent=19 // pred_region
        %p364 = scmp.lt.s32.totalorder %s23, 1
        %s365 = scalar_select %p364, %s23, 1
        %s366 = scalar_lea.vmem %s7, %s365
      $region48: #{mv2_block_ssn.1} parent=19 // pred_fallthru
        _
      // Predicated region
      $region49: #{mv2_block_ssn.1} parent=19 // pred_check
        %p367 = pneg %p254
      $region50: #{mv2_block_ssn.1} parent=19 // pred_check_branch
        %369 = sbr.rel (%p367) target = $region52
      $region51: #{mv2_block_ssn.1} parent=19 // pred_region
        %p370 = scmp.lt.s32.totalorder %s22, 1
        %s371 = scalar_select %p370, %s22, 1
        %p372 = scmp.lt.s32.totalorder %s23, 1
        %s373 = scalar_select %p372, %s23, 1
        %s374 = smul.addr %s371, 2
        %s375 = sadd.s32 %s373, %s374
        %s376 = smul.addr %s375, 8
        %s377 = scalar_lea.vmem %s8, %s376
      $region52: #{mv2_block_ssn.1} parent=19 // pred_fallthru
        _
    $region20: #{mv2_block_ssn.1} parent=5 // pred_fallthru
      _
    %p378 = scmp.le.s32.totalorder 1, %s15
    %p379 = scmp.lt.s32.totalorder %s15, 5
    %p380 = pnand %p378, %p379
    %p381 = pneg %p380
    // Predicated region
    $region53: #{mv2_block_ssn.1} parent=5 // pred_check
      _
    $region54: #{mv2_block_ssn.1} parent=5 // pred_check_branch
      %383 = sbr.rel (%p380) target = $region56
    $region55: #{mv2_block_ssn.1} parent=5 // pred_region
      %s384 = ssub.s32 %s15, 1
      %p385 = scmp.lt.s32.totalorder %s24, 1
      %s386 = scalar_select %p385, %s24, 1
      %p387 = scmp.lt.s32.totalorder %s25, 1
      %s388 = scalar_select %p387, %s25, 1
      %s389 = smul.addr %s388, 2
      %s390 = smul.addr %s386, 4
      %s391 = sadd.s32 %s389, %s390
      %s392 = smul.addr %s391, 4
      %s393 = scalar_lea.vmem %s0, %s392
      %p394 = pneg %p55
      %p395 = pneg %p52
      %p396 = pneg %p76
      %p397 = pneg %p73
      %p398 = scmp.lt.s32.totalorder %s25, 1
      %s399 = scalar_select %p398, %s25, 1
      %s400 = smul.addr %s399, 6
      %s401 = smul.addr %s400, 8
      %s402 = scalar_lea.vmem %s2, %s401
      %p403 = pneg %p102
      %p404 = pneg %p99
      %p405 = scmp.lt.s32.totalorder %s25, 1
      %s406 = scalar_select %p405, %s25, 1
      %s407 = smul.addr %s406, 6
      %s408 = smul.addr %s407, 8
      %s409 = scalar_lea.vmem %s3, %s408
      %p410 = pneg %p128
      %p411 = pneg %p125
      %p412 = scmp.lt.s32.totalorder %s25, 1
      %s413 = scalar_select %p412, %s25, 1
      %s414 = smul.addr %s413, 4
      %s415 = smul.addr %s414, 8
      %s416 = scalar_lea.vmem %s4, %s415
      %p417 = pneg %p154
      %p418 = pneg %p151
      %p419 = scmp.lt.s32.totalorder %s25, 1
      %s420 = scalar_select %p419, %s25, 1
      %s421 = smul.addr %s420, 2
      %s422 = scalar_lea.vmem %s5, %s421
      %p423 = pneg %p180
      %p424 = pneg %p177
      %p425 = scmp.lt.s32.totalorder %s25, 1
      %s426 = scalar_select %p425, %s25, 1
      %s427 = smul.addr %s426, 32
      %s428 = smul.addr %s427, 4
      %s429 = scalar_lea.vmem %s6, %s428
      %p430 = pneg %p206
      %p431 = pneg %p203
      %p432 = scmp.lt.s32.totalorder %s25, 1
      %s433 = scalar_select %p432, %s25, 1
      %s434 = scalar_lea.vmem %s7, %s433
      %p435 = pneg %p232
      %p436 = pneg %p229
      %p437 = scmp.lt.s32.totalorder %s24, 1
      %s438 = scalar_select %p437, %s24, 1
      %p439 = scmp.lt.s32.totalorder %s25, 1
      %s440 = scalar_select %p439, %s25, 1
      %s441 = smul.addr %s438, 2
      %s442 = sadd.s32 %s440, %s441
      %s443 = smul.addr %s442, 8
      %s444 = scalar_lea.vmem %s8, %s443
      %p445 = pneg %p260
      %p446 = pneg %p257
      %p447 = pneg %p288
      %p448 = pneg %p285
      %p449 = scmp.lt.s32.totalorder %s24, 1
      %s450 = scalar_select %p449, %s24, 1
      %p451 = scmp.lt.s32.totalorder %s25, 1
      %s452 = scalar_select %p451, %s25, 1
      %s453 = smul.addr %s450, 2
      %s454 = sadd.s32 %s452, %s453
      %s455 = smul.addr %s454, 8
      %s456 = scalar_lea.vmem %s9, %s455
      %p457 = scmp.lt.s32.totalorder %s24, 1
      %s458 = scalar_select %p457, %s24, 1
      %p459 = scmp.lt.s32.totalorder %s25, 1
      %s460 = scalar_select %p459, %s25, 1
      %s461 = smul.addr %s460, 2
      %s462 = smul.addr %s458, 4
      %s463 = sadd.s32 %s461, %s462
      %s464 = smul.addr %s463, 4
      %s465 = scalar_lea.vmem %s0, %s464
      %p466 = scmp.lt.s32.totalorder %s25, 1
      %s467 = scalar_select %p466, %s25, 1
      %s468 = smul.addr %s467, 6
      %s469 = smul.addr %s468, 8
      %s470 = scalar_lea.vmem %s2, %s469
      %p471 = scmp.lt.s32.totalorder %s25, 1
      %s472 = scalar_select %p471, %s25, 1
      %s473 = smul.addr %s472, 6
      %s474 = smul.addr %s473, 8
      %s475 = scalar_lea.vmem %s3, %s474
      %p476 = scmp.lt.s32.totalorder %s25, 1
      %s477 = scalar_select %p476, %s25, 1
      %s478 = smul.addr %s477, 4
      %s479 = smul.addr %s478, 8
      %s480 = scalar_lea.vmem %s4, %s479
      %p481 = scmp.lt.s32.totalorder %s25, 1
      %s482 = scalar_select %p481, %s25, 1
      %s483 = smul.addr %s482, 2
      %s484 = scalar_lea.vmem %s5, %s483
      %p485 = scmp.lt.s32.totalorder %s25, 1
      %s486 = scalar_select %p485, %s25, 1
      %s487 = smul.addr %s486, 32
      %s488 = smul.addr %s487, 4
      %s489 = scalar_lea.vmem %s6, %s488
      %p490 = scmp.lt.s32.totalorder %s25, 1
      %s491 = scalar_select %p490, %s25, 1
      %s492 = scalar_lea.vmem %s7, %s491
      %p493 = scmp.lt.s32.totalorder %s24, 1
      %s494 = scalar_select %p493, %s24, 1
      %p495 = scmp.lt.s32.totalorder %s25, 1
      %s496 = scalar_select %p495, %s25, 1
      %s497 = smul.addr %s494, 2
      %s498 = sadd.s32 %s496, %s497
      %s499 = smul.addr %s498, 8
      %s500 = scalar_lea.vmem %s8, %s499
      %p501 = scmp.lt.s32.totalorder %s24, 1
      %s502 = scalar_select %p501, %s24, 1
      %p503 = scmp.lt.s32.totalorder %s25, 1
      %s504 = scalar_select %p503, %s25, 1
      %s505 = smul.addr %s502, 2
      %s506 = sadd.s32 %s504, %s505
      %s507 = smul.addr %s506, 8
      %s508 = scalar_lea.vmem %s9, %s507
      %v510 = vld [vmem:[%s465] sm:$0xf]
      %v511 = vld [vmem:[%s465 + $0x4] sm:$0x1]
      %v512 = vld [vmem:[%s1] sm:$0xff]
      %v513 = vld [vmem:[%s1 + $0x8] sm:$0xf]
      %v514 = vld [vmem:[%s1 + $0xc] sm:$0xff]
      %v515 = vld [vmem:[%s1 + $0x14] sm:$0xf]
      %v516 = vld [vmem:[%s1 + $0x18] sm:$0xff]
      %v517 = vld [vmem:[%s1 + $0x20] sm:$0xf]
      %v518 = vld [vmem:[%s1 + $0x24] sm:$0xff]
      %v519 = vld [vmem:[%s1 + $0x2c] sm:$0xf]
      %v520 = vld [vmem:[%s1 + $0x30] sm:$0xff]
      %v521 = vld [vmem:[%s1 + $0x38] sm:$0xf]
      %v522 = vld [vmem:[%s1 + $0x3c] sm:$0xff]
      %v523 = vld [vmem:[%s1 + $0x44] sm:$0xf]
      %v524 = vld [vmem:[%s1 + $0x48] sm:$0xff]
      %v525 = vld [vmem:[%s1 + $0x50] sm:$0xf]
      %v526 = vld [vmem:[%s1 + $0x54] sm:$0xff]
      %v527 = vld [vmem:[%s1 + $0x5c] sm:$0xf]
      %v528 = vld [vmem:[%s1 + $0x60] sm:$0xff]
      %v529 = vld [vmem:[%s1 + $0x68] sm:$0xf]
      %v530 = vld [vmem:[%s1 + $0x6c] sm:$0xff]
      %v531 = vld [vmem:[%s1 + $0x74] sm:$0xf]
      %v532 = vld [vmem:[%s1 + $0x78] sm:$0xff]
      %v533 = vld [vmem:[%s1 + $0x80] sm:$0xf]
      %v534 = vld [vmem:[%s1 + $0x84] sm:$0xff]
      %v535 = vld [vmem:[%s1 + $0x8c] sm:$0xf]
      %v538 = vunpack.c.l.b16 %v510
      %v539 = vunpack.c.l.b16 %v511
      %v540 = vpack.c.b16 %v539, %v538
      %v565 = vunpack.c.l.b16 %v512
      %v566 = vunpack.c.h.b16 %v512
      %v567 = vunpack.c.l.b16 %v513
      %v568 = vunpack.c.l.b16 %v514
      %v569 = vunpack.c.h.b16 %v514
      %v570 = vunpack.c.l.b16 %v515
      %v571 = vunpack.c.l.b16 %v516
      %v572 = vunpack.c.h.b16 %v516
      %v573 = vunpack.c.l.b16 %v517
      %v574 = vunpack.c.l.b16 %v518
      %v575 = vunpack.c.h.b16 %v518
      %v576 = vunpack.c.l.b16 %v519
      %v577 = vunpack.c.l.b16 %v520
      %v578 = vunpack.c.h.b16 %v520
      %v579 = vunpack.c.l.b16 %v521
      %v580 = vunpack.c.l.b16 %v522
      %v581 = vunpack.c.h.b16 %v522
      %v582 = vunpack.c.l.b16 %v523
      %v583 = vunpack.c.l.b16 %v524
      %v584 = vunpack.c.h.b16 %v524
      %v585 = vunpack.c.l.b16 %v525
      %v586 = vunpack.c.l.b16 %v526
      %v587 = vunpack.c.h.b16 %v526
      %v588 = vunpack.c.l.b16 %v527
      %v589 = vunpack.c.l.b16 %v528
      %v590 = vunpack.c.h.b16 %v528
      %v591 = vunpack.c.l.b16 %v529
      %v592 = vunpack.c.l.b16 %v530
      %v593 = vunpack.c.h.b16 %v530
      %v594 = vunpack.c.l.b16 %v531
      %v595 = vunpack.c.l.b16 %v532
      %v596 = vunpack.c.h.b16 %v532
      %v597 = vunpack.c.l.b16 %v533
      %v598 = vunpack.c.l.b16 %v534
      %v599 = vunpack.c.h.b16 %v534
      %v600 = vunpack.c.l.b16 %v535
      %v601 = vpack.c.b16 %v568, %v565
      %v602 = vpack.c.b16 %v569, %v566
      %v603 = vpack.c.b16 %v570, %v567
      %v604 = vpack.c.b16 %v574, %v571
      %v605 = vpack.c.b16 %v575, %v572
      %v606 = vpack.c.b16 %v576, %v573
      %v607 = vpack.c.b16 %v580, %v577
      %v608 = vpack.c.b16 %v581, %v578
      %v609 = vpack.c.b16 %v582, %v579
      %v610 = vpack.c.b16 %v586, %v583
      %v611 = vpack.c.b16 %v587, %v584
      %v612 = vpack.c.b16 %v588, %v585
      %v613 = vpack.c.b16 %v592, %v589
      %v614 = vpack.c.b16 %v593, %v590
      %v615 = vpack.c.b16 %v594, %v591
      %v616 = vpack.c.b16 %v598, %v595
      %v617 = vpack.c.b16 %v599, %v596
      %v618 = vpack.c.b16 %v600, %v597
      %vm637 = vcmask 785408
      %v639 = vsel %vm637, %v540, 0
      %641 = vmatpush.bf16.msra.mxu0 0
      %642 = vmatpush.bf16.msra.mxu0 0
      %643 = vmatpush.bf16.msra.mxu0 %v616
      %644 = vmatpush.bf16.msra.mxu0 %v613
      %645 = vmatpush.bf16.msra.mxu0 %v610
      %646 = vmatpush.bf16.msra.mxu0 %v607
      %647 = vmatpush.bf16.msra.mxu0 %v604
      %648 = vmatpush.bf16.msra.mxu0 %v601
      %649 = vmatmul.bf16.gmra.mxu0 %v639
      %v650 = vpop.f32.mrf.mxu0
      %v651 = vadd.f32 0.0, %v650
      %v652 = vpop.f32.mrf.mxu0
      %v653 = vadd.f32 0.0, %v652
      %654 = vdwg.mxu0
      %655 = vmatpush.bf16.msra.mxu0 0
      %656 = vmatpush.bf16.msra.mxu0 0
      %657 = vmatpush.bf16.msra.mxu0 %v617
      %658 = vmatpush.bf16.msra.mxu0 %v614
      %659 = vmatpush.bf16.msra.mxu0 %v611
      %660 = vmatpush.bf16.msra.mxu0 %v608
      %661 = vmatpush.bf16.msra.mxu0 %v605
      %662 = vmatpush.bf16.msra.mxu0 %v602
      %663 = vmatmul.bf16.gmra.mxu0 %v639
      %v664 = vpop.f32.mrf.mxu0
      %v665 = vadd.f32 0.0, %v664
      %v666 = vpop.f32.mrf.mxu0
      %v667 = vadd.f32 0.0, %v666
      %668 = vdwg.mxu0
      %669 = vmatpush.bf16.msra.mxu0 0
      %670 = vmatpush.bf16.msra.mxu0 0
      %671 = vmatpush.bf16.msra.mxu0 %v618
      %672 = vmatpush.bf16.msra.mxu0 %v615
      %673 = vmatpush.bf16.msra.mxu0 %v612
      %674 = vmatpush.bf16.msra.mxu0 %v609
      %675 = vmatpush.bf16.msra.mxu0 %v606
      %676 = vmatpush.bf16.msra.mxu0 %v603
      %677 = vmatmul.bf16.gmra.mxu0 %v639
      %v678 = vpop.f32.mrf.mxu0
      %v679 = vadd.f32 0.0, %v678
      %v680 = vpop.f32.mrf.mxu0
      %v681 = vadd.f32 0.0, %v680
      %682 = vdwg.mxu0
      %v683 = vld [vmem:[%s470] sm:$0xff]
      %v684 = vld [vmem:[%s470 + $0x8] sm:$0xff]
      %v685 = vld [vmem:[%s470 + $0x10] sm:$0xff]
      %v686 = vld [vmem:[%s470 + $0x18] sm:$0x3]
      %v687 = vld [vmem:[%s470 + $0x20] sm:$0x3]
      %v688 = vld [vmem:[%s470 + $0x28] sm:$0x3]
      %v689 = vmul.f32 %v651, %v683
      %v690 = vmul.f32 %v665, %v684
      %v691 = vmul.f32 %v679, %v685
      %v692 = vmul.f32 %v653, %v686
      %v693 = vmul.f32 %v667, %v687
      %v694 = vmul.f32 %v681, %v688
      %v695 = vld [vmem:[%s475] sm:$0xff]
      %v696 = vld [vmem:[%s475 + $0x8] sm:$0xff]
      %v697 = vld [vmem:[%s475 + $0x10] sm:$0xff]
      %v698 = vld [vmem:[%s475 + $0x18] sm:$0x3]
      %v699 = vld [vmem:[%s475 + $0x20] sm:$0x3]
      %v700 = vld [vmem:[%s475 + $0x28] sm:$0x3]
      %v701 = vadd.f32 %v689, %v695
      %v702 = vadd.f32 %v690, %v696
      %v703 = vadd.f32 %v691, %v697
      %v704 = vadd.f32 %v692, %v698
      %v705 = vadd.f32 %v693, %v699
      %v706 = vadd.f32 %v694, %v700
      %v707 = vsub.f32 0.0, %v701
      %v708 = vsub.f32 0.0, %v702
      %v709 = vsub.f32 0.0, %v703
      %v710 = vsub.f32 0.0, %v704
      %v711 = vsub.f32 0.0, %v705
      %v712 = vsub.f32 0.0, %v706
      %v713 = vmul.f32 %v707, 1.442695
      %v714 = vpow.pop %v713
      %v715 = vmul.f32 %v708, 1.442695
      %v716 = vpow.pop %v715
      %v717 = vmul.f32 %v709, 1.442695
      %v718 = vpow.pop %v717
      %v719 = vmul.f32 %v710, 1.442695
      %v720 = vpow.pop %v719
      %v721 = vmul.f32 %v711, 1.442695
      %v722 = vpow.pop %v721
      %v723 = vmul.f32 %v712, 1.442695
      %v724 = vpow.pop %v723
      %v725 = vadd.f32 %v714, 1.0
      %v726 = vadd.f32 %v716, 1.0
      %v727 = vadd.f32 %v718, 1.0
      %v728 = vadd.f32 %v720, 1.0
      %v729 = vadd.f32 %v722, 1.0
      %v730 = vadd.f32 %v724, 1.0
      %v731 = vrcp.pop %v725
      %v732 = vrcp.pop %v726
      %v733 = vrcp.pop %v727
      %v734 = vrcp.pop %v728
      %v735 = vrcp.pop %v729
      %v736 = vrcp.pop %v730
      %v737 = vmul.f32 %v701, %v731
      %v738 = vmul.f32 %v702, %v732
      %v739 = vmul.f32 %v703, %v733
      %v740 = vmul.f32 %v704, %v734
      %v741 = vmul.f32 %v705, %v735
      %v742 = vmul.f32 %v706, %v736
      %v743 = vld [vmem:[%s480] ss:$8 sm:$0x3]
      %v745 = vperm.slane %v743, 0
      %v746 = vperm.slane %v743, 1
      %v749 = vmul.f32 %v737, %v745
      %v750 = vmul.f32 %v738, %v746
      %v751 = vadd.f32 %v749, 0.0
      %v752 = vadd.f32 %v750, 0.0
      %s753 = scalar_lea.vmem %s480, 1
      %v754 = vld [vmem:[%s753] ss:$8 sm:$0x3]
      %v756 = vperm.slane %v754, 0
      %v757 = vperm.slane %v754, 1
      %758 = vrot.lane.b32.xlu0 %v756, 16
      %v759 = vpop.permute.xlu0 %758
      %760 = vrot.lane.b32.xlu0 %v757, 16
      %v761 = vpop.permute.xlu0 %760
      %vm762 = vcmask 130048
      %v763 = vsel %vm762, %v759, %v761
      %v767 = vmul.f32 %v737, %v759
      %v768 = vmul.f32 %v738, %v763
      %v769 = vmul.f32 %v739, %v761
      %773 = vrot.lane.b32.xlu0 %v767, 112
      %v774 = vpop.permute.xlu0 %773
      %775 = vrot.lane.b32.xlu0 %v768, 112
      %v776 = vpop.permute.xlu0 %775
      %777 = vrot.lane.b32.xlu0 %v769, 112
      %v778 = vpop.permute.xlu0 %777
      %vm779 = vcmask 916480
      %v780 = vsel %vm779, %v774, %v776
      %v781 = vsel %vm779, %v776, %v778
      %v784 = vadd.f32 %v751, %v780
      %v785 = vadd.f32 %v752, %v781
      %s786 = scalar_lea.vmem %s480, 2
      %v787 = vld [vmem:[%s786] ss:$8 sm:$0x3]
      %v789 = vperm.slane %v787, 0
      %v790 = vperm.slane %v787, 1
      %791 = vrot.lane.b32.xlu0 %v789, 32
      %v792 = vpop.permute.xlu0 %791
      %793 = vrot.lane.b32.xlu0 %v790, 32
      %v794 = vpop.permute.xlu0 %793
      %vm795 = vcmask 261120
      %v796 = vsel %vm795, %v792, %v794
      %v800 = vmul.f32 %v737, %v792
      %v801 = vmul.f32 %v738, %v796
      %v802 = vmul.f32 %v739, %v794
      %806 = vrot.lane.b32.xlu0 %v800, 96
      %v807 = vpop.permute.xlu0 %806
      %808 = vrot.lane.b32.xlu0 %v801, 96
      %v809 = vpop.permute.xlu0 %808
      %810 = vrot.lane.b32.xlu0 %v802, 96
      %v811 = vpop.permute.xlu0 %810
      %v812 = vsel %vm637, %v807, %v809
      %v813 = vsel %vm637, %v809, %v811
      %v816 = vadd.f32 %v784, %v812
      %v817 = vadd.f32 %v785, %v813
      %s818 = scalar_lea.vmem %s480, 3
      %v819 = vld [vmem:[%s818] ss:$8 sm:$0x3]
      %v821 = vperm.slane %v819, 0
      %v822 = vperm.slane %v819, 1
      %v825 = vmul.f32 %v737, %v821
      %v826 = vmul.f32 %v738, %v822
      %v827 = vmul.f32 %v740, %v821
      %v828 = vmul.f32 %v741, %v822
      %vm833 = vcmask 1046528
      %v834 = vrot.slane %v825, 1
      %v835 = vrot.slane %v827, 1
      %v836 = vsel %vm833, %v834, %v835
      %v837 = vrot.slane %v826, 1
      %v838 = vrot.slane %v828, 1
      %v839 = vsel %vm833, %v837, %v838
      %v842 = vadd.f32 %v816, %v836
      %v843 = vadd.f32 %v817, %v839
      %s844 = scalar_lea.vmem %s480, 4
      %v845 = vld [vmem:[%s844] ss:$8 sm:$0x3]
      %v847 = vperm.slane %v845, 0
      %v848 = vperm.slane %v845, 1
      %849 = vrot.lane.b32.xlu0 %v847, 16
      %v850 = vpop.permute.xlu0 %849
      %851 = vrot.lane.b32.xlu0 %v848, 16
      %v852 = vpop.permute.xlu0 %851
      %v853 = vsel %vm762, %v850, %v852
      %v857 = vmul.f32 %v737, %v850
      %v858 = vmul.f32 %v738, %v853
      %v859 = vmul.f32 %v739, %v852
      %v860 = vmul.f32 %v740, %v850
      %v861 = vmul.f32 %v741, %v853
      %v862 = vmul.f32 %v742, %v852
      %v869 = vrot.slane %v857, 1
      %v870 = vrot.slane %v860, 1
      %v871 = vsel %vm833, %v869, %v870
      %v872 = vrot.slane %v858, 1
      %v873 = vrot.slane %v861, 1
      %v874 = vsel %vm833, %v872, %v873
      %v875 = vrot.slane %v859, 1
      %v876 = vrot.slane %v862, 1
      %v877 = vsel %vm833, %v875, %v876
      %878 = vrot.lane.b32.xlu0 %v871, 112
      %v879 = vpop.permute.xlu0 %878
      %880 = vrot.lane.b32.xlu0 %v874, 112
      %v881 = vpop.permute.xlu0 %880
      %882 = vrot.lane.b32.xlu0 %v877, 112
      %v883 = vpop.permute.xlu0 %882
      %v884 = vsel %vm779, %v879, %v881
      %v885 = vsel %vm779, %v881, %v883
      %v888 = vadd.f32 %v842, %v884
      %v889 = vadd.f32 %v843, %v885
      %s890 = scalar_lea.vmem %s480, 5
      %v891 = vld [vmem:[%s890] ss:$8 sm:$0x3]
      %v893 = vperm.slane %v891, 0
      %v894 = vperm.slane %v891, 1
      %895 = vrot.lane.b32.xlu0 %v893, 32
      %v896 = vpop.permute.xlu0 %895
      %897 = vrot.lane.b32.xlu0 %v894, 32
      %v898 = vpop.permute.xlu0 %897
      %v899 = vsel %vm795, %v896, %v898
      %v903 = vmul.f32 %v737, %v896
      %v904 = vmul.f32 %v738, %v899
      %v905 = vmul.f32 %v739, %v898
      %v906 = vmul.f32 %v740, %v896
      %v907 = vmul.f32 %v741, %v899
      %v908 = vmul.f32 %v742, %v898
      %v915 = vrot.slane %v903, 1
      %v916 = vrot.slane %v906, 1
      %v917 = vsel %vm833, %v915, %v916
      %v918 = vrot.slane %v904, 1
      %v919 = vrot.slane %v907, 1
      %v920 = vsel %vm833, %v918, %v919
      %v921 = vrot.slane %v905, 1
      %v922 = vrot.slane %v908, 1
      %v923 = vsel %vm833, %v921, %v922
      %924 = vrot.lane.b32.xlu0 %v917, 96
      %v925 = vpop.permute.xlu0 %924
      %926 = vrot.lane.b32.xlu0 %v920, 96
      %v927 = vpop.permute.xlu0 %926
      %928 = vrot.lane.b32.xlu0 %v923, 96
      %v929 = vpop.permute.xlu0 %928
      %v930 = vsel %vm637, %v925, %v927
      %v931 = vsel %vm637, %v927, %v929
      %v934 = vadd.f32 %v888, %v930
      %v935 = vadd.f32 %v889, %v931
      %s936 = scalar_lea.vmem %s480, 6
      %v937 = vld [vmem:[%s936] ss:$8 sm:$0x3]
      %v939 = vperm.slane %v937, 0
      %v940 = vperm.slane %v937, 1
      %v943 = vmul.f32 %v737, %v939
      %v944 = vmul.f32 %v738, %v940
      %v945 = vmul.f32 %v740, %v939
      %v946 = vmul.f32 %v741, %v940
      %vm951 = vcmask 1045504
      %v952 = vrot.slane %v943, 2
      %v953 = vrot.slane %v945, 2
      %v954 = vsel %vm951, %v952, %v953
      %v955 = vrot.slane %v944, 2
      %v956 = vrot.slane %v946, 2
      %v957 = vsel %vm951, %v955, %v956
      %v960 = vadd.f32 %v934, %v954
      %v961 = vadd.f32 %v935, %v957
      %s962 = scalar_lea.vmem %s480, 7
      %v963 = vld [vmem:[%s962] ss:$8 sm:$0x3]
      %v965 = vperm.slane %v963, 0
      %v966 = vperm.slane %v963, 1
      %967 = vrot.lane.b32.xlu0 %v965, 16
      %v968 = vpop.permute.xlu0 %967
      %969 = vrot.lane.b32.xlu0 %v966, 16
      %v970 = vpop.permute.xlu0 %969
      %v971 = vsel %vm762, %v968, %v970
      %v975 = vmul.f32 %v737, %v968
      %v976 = vmul.f32 %v738, %v971
      %v977 = vmul.f32 %v739, %v970
      %v978 = vmul.f32 %v740, %v968
      %v979 = vmul.f32 %v741, %v971
      %v980 = vmul.f32 %v742, %v970
      %v987 = vrot.slane %v975, 2
      %v988 = vrot.slane %v978, 2
      %v989 = vsel %vm951, %v987, %v988
      %v990 = vrot.slane %v976, 2
      %v991 = vrot.slane %v979, 2
      %v992 = vsel %vm951, %v990, %v991
      %v993 = vrot.slane %v977, 2
      %v994 = vrot.slane %v980, 2
      %v995 = vsel %vm951, %v993, %v994
      %996 = vrot.lane.b32.xlu0 %v989, 112
      %v997 = vpop.permute.xlu0 %996
      %998 = vrot.lane.b32.xlu0 %v992, 112
      %v999 = vpop.permute.xlu0 %998
      %1000 = vrot.lane.b32.xlu0 %v995, 112
      %v1001 = vpop.permute.xlu0 %1000
      %v1002 = vsel %vm779, %v997, %v999
      %v1003 = vsel %vm779, %v999, %v1001
      %v1006 = vadd.f32 %v960, %v1002
      %v1007 = vadd.f32 %v961, %v1003
      %s1008 = scalar_lea.vmem %s480, 16
      %v1009 = vld [vmem:[%s1008] ss:$8 sm:$0x3]
      %v1011 = vperm.slane %v1009, 0
      %v1012 = vperm.slane %v1009, 1
      %1013 = vrot.lane.b32.xlu0 %v1011, 32
      %v1014 = vpop.permute.xlu0 %1013
      %1015 = vrot.lane.b32.xlu0 %v1012, 32
      %v1016 = vpop.permute.xlu0 %1015
      %v1017 = vsel %vm795, %v1014, %v1016
      %v1021 = vmul.f32 %v737, %v1014
      %v1022 = vmul.f32 %v738, %v1017
      %v1023 = vmul.f32 %v739, %v1016
      %v1024 = vmul.f32 %v740, %v1014
      %v1025 = vmul.f32 %v741, %v1017
      %v1026 = vmul.f32 %v742, %v1016
      %v1033 = vrot.slane %v1021, 2
      %v1034 = vrot.slane %v1024, 2
      %v1035 = vsel %vm951, %v1033, %v1034
      %v1036 = vrot.slane %v1022, 2
      %v1037 = vrot.slane %v1025, 2
      %v1038 = vsel %vm951, %v1036, %v1037
      %v1039 = vrot.slane %v1023, 2
      %v1040 = vrot.slane %v1026, 2
      %v1041 = vsel %vm951, %v1039, %v1040
      %1042 = vrot.lane.b32.xlu0 %v1035, 96
      %v1043 = vpop.permute.xlu0 %1042
      %1044 = vrot.lane.b32.xlu0 %v1038, 96
      %v1045 = vpop.permute.xlu0 %1044
      %1046 = vrot.lane.b32.xlu0 %v1041, 96
      %v1047 = vpop.permute.xlu0 %1046
      %v1048 = vsel %vm637, %v1043, %v1045
      %v1049 = vsel %vm637, %v1045, %v1047
      %v1052 = vadd.f32 %v1006, %v1048
      %v1053 = vadd.f32 %v1007, %v1049
      %v1054 = vld [vmem:[%s484] sm:$0x3]
      %v1056 = vperm.slane %v1054, 0
      %v1057 = vperm.slane %v1054, 1
      %v1060 = vadd.f32 %v1052, %v1056
      %v1061 = vadd.f32 %v1053, %v1057
      %v1062 = vsub.f32 0.0, %v1060
      %v1063 = vsub.f32 0.0, %v1061
      %v1064 = vmul.f32 %v1062, 1.442695
      %v1065 = vpow.pop %v1064
      %v1066 = vmul.f32 %v1063, 1.442695
      %v1067 = vpow.pop %v1066
      %v1068 = vadd.f32 %v1065, 1.0
      %v1069 = vadd.f32 %v1067, 1.0
      %v1070 = vrcp.pop %v1068
      %v1071 = vrcp.pop %v1069
      %v1072 = vmul.f32 %v1060, %v1070
      %v1073 = vmul.f32 %v1061, %v1071
      %v1074 = vpack.c.bf16 %v1072, %v1072
      %v1075 = vpack.c.bf16 %v1073, %v1073
      %v1076 = vld [vmem:[%s489] sm:$0xf]
      %v1077 = vld [vmem:[%s489 + $0x4] sm:$0xf]
      %v1078 = vld [vmem:[%s489 + $0x8] sm:$0xf]
      %v1079 = vld [vmem:[%s489 + $0xc] sm:$0xf]
      %v1080 = vld [vmem:[%s489 + $0x10] sm:$0xf]
      %v1081 = vld [vmem:[%s489 + $0x14] sm:$0xf]
      %v1082 = vld [vmem:[%s489 + $0x18] sm:$0xf]
      %v1083 = vld [vmem:[%s489 + $0x1c] sm:$0xf]
      %v1084 = vld [vmem:[%s489 + $0x20] sm:$0xf]
      %v1085 = vld [vmem:[%s489 + $0x24] sm:$0xf]
      %v1086 = vld [vmem:[%s489 + $0x28] sm:$0xf]
      %v1087 = vld [vmem:[%s489 + $0x2c] sm:$0xf]
      %v1088 = vld [vmem:[%s489 + $0x30] sm:$0xf]
      %v1089 = vld [vmem:[%s489 + $0x34] sm:$0xf]
      %v1090 = vld [vmem:[%s489 + $0x38] sm:$0xf]
      %v1091 = vld [vmem:[%s489 + $0x3c] sm:$0xf]
      %v1092 = vld [vmem:[%s489 + $0x40] sm:$0xf]
      %v1093 = vld [vmem:[%s489 + $0x44] sm:$0xf]
      %v1094 = vld [vmem:[%s489 + $0x48] sm:$0xf]
      %v1095 = vld [vmem:[%s489 + $0x4c] sm:$0xf]
      %v1096 = vld [vmem:[%s489 + $0x50] sm:$0xf]
      %v1097 = vld [vmem:[%s489 + $0x54] sm:$0xf]
      %v1098 = vld [vmem:[%s489 + $0x58] sm:$0xf]
      %v1099 = vld [vmem:[%s489 + $0x5c] sm:$0xf]
      %v1100 = vld [vmem:[%s489 + $0x60] sm:$0xf]
      %v1101 = vld [vmem:[%s489 + $0x64] sm:$0xf]
      %v1102 = vld [vmem:[%s489 + $0x68] sm:$0xf]
      %v1103 = vld [vmem:[%s489 + $0x6c] sm:$0xf]
      %v1104 = vld [vmem:[%s489 + $0x70] sm:$0xf]
      %v1105 = vld [vmem:[%s489 + $0x74] sm:$0xf]
      %v1106 = vld [vmem:[%s489 + $0x78] sm:$0xf]
      %v1107 = vld [vmem:[%s489 + $0x7c] sm:$0xf]
      %v1108 = vld [vmem:[%s492] sm:$0x1]
      %v1110 = vperm.slane %v1108, 0
      %v1144 = vunpack.c.l.b16 %v1076
      %v1145 = vunpack.c.l.b16 %v1077
      %v1146 = vunpack.c.l.b16 %v1078
      %v1147 = vunpack.c.l.b16 %v1079
      %v1148 = vunpack.c.l.b16 %v1080
      %v1149 = vunpack.c.l.b16 %v1081
      %v1150 = vunpack.c.l.b16 %v1082
      %v1151 = vunpack.c.l.b16 %v1083
      %v1152 = vunpack.c.l.b16 %v1084
      %v1153 = vunpack.c.l.b16 %v1085
      %v1154 = vunpack.c.l.b16 %v1086
      %v1155 = vunpack.c.l.b16 %v1087
      %v1156 = vunpack.c.l.b16 %v1088
      %v1157 = vunpack.c.l.b16 %v1089
      %v1158 = vunpack.c.l.b16 %v1090
      %v1159 = vunpack.c.l.b16 %v1091
      %v1160 = vunpack.c.l.b16 %v1092
      %v1161 = vunpack.c.l.b16 %v1093
      %v1162 = vunpack.c.l.b16 %v1094
      %v1163 = vunpack.c.l.b16 %v1095
      %v1164 = vunpack.c.l.b16 %v1096
      %v1165 = vunpack.c.l.b16 %v1097
      %v1166 = vunpack.c.l.b16 %v1098
      %v1167 = vunpack.c.l.b16 %v1099
      %v1168 = vunpack.c.l.b16 %v1100
      %v1169 = vunpack.c.l.b16 %v1101
      %v1170 = vunpack.c.l.b16 %v1102
      %v1171 = vunpack.c.l.b16 %v1103
      %v1172 = vunpack.c.l.b16 %v1104
      %v1173 = vunpack.c.l.b16 %v1105
      %v1174 = vunpack.c.l.b16 %v1106
      %v1175 = vunpack.c.l.b16 %v1107
      %v1176 = vpack.c.b16 %v1145, %v1144
      %v1177 = vpack.c.b16 %v1147, %v1146
      %v1178 = vpack.c.b16 %v1149, %v1148
      %v1179 = vpack.c.b16 %v1151, %v1150
      %v1180 = vpack.c.b16 %v1153, %v1152
      %v1181 = vpack.c.b16 %v1155, %v1154
      %v1182 = vpack.c.b16 %v1157, %v1156
      %v1183 = vpack.c.b16 %v1159, %v1158
      %v1184 = vpack.c.b16 %v1161, %v1160
      %v1185 = vpack.c.b16 %v1163, %v1162
      %v1186 = vpack.c.b16 %v1165, %v1164
      %v1187 = vpack.c.b16 %v1167, %v1166
      %v1188 = vpack.c.b16 %v1169, %v1168
      %v1189 = vpack.c.b16 %v1171, %v1170
      %v1190 = vpack.c.b16 %v1173, %v1172
      %v1191 = vpack.c.b16 %v1175, %v1174
      %1208 = vmatpush.bf16.msra.mxu0 %v1183
      %1209 = vmatpush.bf16.msra.mxu0 %v1182
      %1210 = vmatpush.bf16.msra.mxu0 %v1181
      %1211 = vmatpush.bf16.msra.mxu0 %v1180
      %1212 = vmatpush.bf16.msra.mxu0 %v1179
      %1213 = vmatpush.bf16.msra.mxu0 %v1178
      %1214 = vmatpush.bf16.msra.mxu0 %v1177
      %1215 = vmatpush.bf16.msra.mxu0 %v1176
      %1216 = vmatmul.bf16.gmra.mxu0 %v1074
      %v1217 = vpop.f32.mrf.mxu0
      %v1218 = vadd.f32 %v1110, %v1217
      %v1219 = vpop.f32.mrf.mxu0
      %1220 = vdwg.mxu0
      %1221 = vmatpush.bf16.msra.mxu0 %v1191
      %1222 = vmatpush.bf16.msra.mxu0 %v1190
      %1223 = vmatpush.bf16.msra.mxu0 %v1189
      %1224 = vmatpush.bf16.msra.mxu0 %v1188
      %1225 = vmatpush.bf16.msra.mxu0 %v1187
      %1226 = vmatpush.bf16.msra.mxu0 %v1186
      %1227 = vmatpush.bf16.msra.mxu0 %v1185
      %1228 = vmatpush.bf16.msra.mxu0 %v1184
      %1229 = vmatmul.bf16.gmra.mxu0 %v1075
      %v1230 = vpop.f32.mrf.mxu0
      %v1231 = vadd.f32 %v1218, %v1230
      %v1232 = vpop.f32.mrf.mxu0
      %1233 = vdwg.mxu0
      %v1234 = vld [vmem:[%s500] sm:$0xff]
      %v1235 = vadd.f32 %v1231, %v1234
      %vm1236 = vcmask 523264
      %1237 = vst.msk [vmem:[%s508] sm:$0xff] %vm1236, %v1235
      %p1238 = scmp.lt.s32.totalorder %s24, 1
      %s1239 = scalar_select %p1238, %s24, 1
      %p1240 = scmp.lt.s32.totalorder %s25, 1
      %s1241 = scalar_select %p1240, %s25, 1
      %s1242 = smul.addr %s1239, 2
      %s1243 = sadd.s32 %s1241, %s1242
      %s1244 = smul.addr %s1243, 8
      %s1245 = scalar_lea.vmem %s9, %s1244
      // Predicated region
      $region57: #{mv2_block_ssn.1} parent=55 // pred_check
        %p1246 = pneg %p285
      $region58: #{mv2_block_ssn.1} parent=55 // pred_check_branch
        %1248 = sbr.rel (%p1246) target = $region60
      $region59: #{mv2_block_ssn.1} parent=55 // pred_region
        _
      $region60: #{mv2_block_ssn.1} parent=55 // pred_fallthru
        _
    $region56: #{mv2_block_ssn.1} parent=5 // pred_fallthru
      _
    %p1249 = scmp.le.s32.totalorder 2, %s15
    // Predicated region
    $region61: #{mv2_block_ssn.1} parent=5 // pred_check
      %p1250 = pneg %p1249
    $region62: #{mv2_block_ssn.1} parent=5 // pred_check_branch
      %1252 = sbr.rel (%p1250) target = $region64
    $region63: #{mv2_block_ssn.1} parent=5 // pred_region
      %s1253 = ssub.s32 %s15, 2
      // Predicated region
      $region65: #{mv2_block_ssn.1} parent=63 // pred_check
        %p1254 = pneg %p291
      $region66: #{mv2_block_ssn.1} parent=63 // pred_check_branch
        %1256 = sbr.rel (%p1254) target = $region68
      $region67: #{mv2_block_ssn.1} parent=63 // pred_region
        %p1257 = scmp.lt.s32.totalorder %s26, 1
        %s1258 = scalar_select %p1257, %s26, 1
        %p1259 = scmp.lt.s32.totalorder %s27, 1
        %s1260 = scalar_select %p1259, %s27, 1
        %s1261 = smul.addr %s1258, 2
        %s1262 = sadd.s32 %s1260, %s1261
        %s1263 = smul.addr %s1262, 8
        %s1264 = scalar_lea.vmem %s9, %s1263
      $region68: #{mv2_block_ssn.1} parent=63 // pred_fallthru
        _
    $region64: #{mv2_block_ssn.1} parent=5 // pred_fallthru
      _
  $region6: #{mv2_block_ssn.1} parent=0 // loop_footer
    %s19 = sadd.s32 1, %s15
  $region7: #{mv2_block_ssn.1} parent=0 // loop_footer_branch
    %14 = sbr.rel target = $region3
  $region8: #{mv2_block_ssn.1} parent=0 // loop_exit
    _

</llo_original>
